<compile_context>
chip_gen: v5e
topology: v5e:2x2
jax: 0.10.0
libtpu: 0.0.40
codegen_flags: <defaults>
</compile_context>

<pallas_src>
import functools

import jax
import jax.numpy as jnp
from jax.experimental import pallas as pl
from jax.experimental.pallas import tpu as pltpu

DICE_WEIGHT = 0.5
BCE_WEIGHT = 0.5
LABEL_SMOOTHING = 0.1
_EPS = 1e-8
_LOG_CLAMP = -100.0  # torch.binary_cross_entropy clamps log terms at -100
_LANES = 128


def _cdiv(a, b):
    return -(-a // b)


def _round_up(x, m):
    return _cdiv(x, m) * m


def _sublane_min(dtype):
    # Minimum sublane tile rows per input dtype width (32/16/8-bit).
    return {4: 8, 2: 16, 1: 32}.get(jnp.dtype(dtype).itemsize, 8)


def _default_core_splits():
    # Only multi-TensorCore parts (v7x) benefit from a "parallel" split axis;
    # on single-TC v5e/v6e it is a serial outer loop with pure overhead.
    try:
        kind = jax.devices()[0].device_kind.lower()
    except Exception:
        return 1
    return 2 if ("v7" in kind or "tpu7" in kind) else 1


def _loss_kernel(preds_ref, targets_ref, out_ref, *, full_rows, rem_lanes,
                 row_tile, chunk_rows, tiles_per_split, single_split,
                 label_smoothing):
    if single_split:
        c = 0
        i = pl.program_id(0)
    else:
        c = pl.program_id(0)   # core-split index ("parallel" axis)
        i = pl.program_id(1)   # row-tile index within the split ("arbitrary")

    @pl.when(i == 0)
    def _init():
        out_ref[...] = jnp.zeros_like(out_ref)

    # Logical (unclamped) tile id -> first global row covered by this tile.
    tile_id = c * tiles_per_split + i
    tile_start_row = tile_id * row_tile
    # A tile needs the validity mask iff it can touch any row >= full_rows
    # (the partially valid edge row, wrapper pad rows, or a clamped duplicate
    # tile).  Everything else takes the mask-free fast path.
    needs_mask = tile_start_row + row_tile > full_rows

    one_minus_2ls = 1.0 - 2.0 * label_smoothing

    def fold(x, rows_in_chunk):
        # (rows, 128) -> (8, 128): sublane-aligned regrouping, VPU adds only.
        return jnp.sum(x.reshape(rows_in_chunk // 8, 8, _LANES), axis=0)

    def accumulate(masked):
        # Static chunk loop over the tile bounds the size of the elementwise
        # intermediates in VMEM (important at row_tile >= 2048 on v7x).
        start = 0
        while start < row_tile:
            size = min(chunk_rows, row_tile - start)
            rows_sl = pl.ds(start, size)

            # Cast to f32 in-kernel; inputs travel over HBM in native dtype.
            p = preds_ref[rows_sl, :].astype(jnp.float32)
            t = targets_ref[rows_sl, :].astype(jnp.float32)

            # Label smoothing, fused form: st = t*(1 - 2*ls) + ls.
            if label_smoothing > 0.0:
                st = t * one_minus_2ls + label_smoothing
            else:
                st = t

            if masked:
                # Row/lane-level validity (no flat index -> no i32 overflow).
                row_ids = jax.lax.broadcasted_iota(jnp.int32, (size, _LANES), 0)
                lane_ids = jax.lax.broadcasted_iota(jnp.int32, (size, _LANES), 1)
                grow = tile_start_row + start + row_ids
                valid = (grow < full_rows) | ((grow == full_rows)
                                              & (lane_ids < rem_lanes))
                p = jnp.where(valid, p, 0.0)
                st = jnp.where(valid, st, 0.0)

            # BCE on probabilities (matches F.binary_cross_entropy incl. the
            # -100 clamp).  Masked lanes give exactly 0:
            #   st=0, p=0 -> 0*(-100) + 1*log(1) = 0.
            # TODO(synk): 2 EUP logs/element are co-critical on v7x only; an
            # exact cheaper rewrite needs a logits interface, accepted as-is.
            log_p = jnp.maximum(jnp.log(p), _LOG_CLAMP)
            log_1mp = jnp.maximum(jnp.log(1.0 - p), _LOG_CLAMP)
            bce_pos = st * log_p + (1.0 - st) * log_1mp  # negated in epilogue

            out_ref[0:8, :] += fold(p * st, size)     # intersection partials
            out_ref[8:16, :] += fold(p, size)         # sum(p) partials
            out_ref[16:24, :] += fold(st, size)       # sum(smoothed t) partials
            out_ref[24:32, :] += fold(bce_pos, size)  # BCE partials (positive)

            start += size

    @pl.when(jnp.logical_not(needs_mask))
    def _fast():
        accumulate(masked=False)

    @pl.when(needs_mask)
    def _tail():
        accumulate(masked=True)


def smoothed_combined_loss(preds, targets, *, dice_weight=DICE_WEIGHT,
                           bce_weight=BCE_WEIGHT,
                           label_smoothing=LABEL_SMOOTHING,
                           max_row_tile=2048, num_core_splits=None):
    """Pallas TPU implementation of SmoothedCombinedLoss.forward.

    preds are probabilities (post-sigmoid), targets are {0,1}; any matching
    shapes / dtypes (all math is f32 in-kernel, reductions accumulate in f32).
    """
    assert preds.shape == targets.shape
    n = preds.size
    assert n > 0

    # Minimum sublane granularity for the involved dtypes (8/16/32 rows).
    g = max(_sublane_min(preds.dtype), _sublane_min(targets.dtype))

    rows = _round_up(max(_cdiv(n, _LANES), 1), g)
    padded_n = rows * _LANES

    p_flat = preds.reshape(-1)
    t_flat = targets.reshape(-1)
    if padded_n != n:
        # Pad values are irrelevant (masked in-kernel).  This full-array copy
        # only triggers when n is not a multiple of g*128.
        # TODO(synk): for huge unaligned inputs, fold the <g*128 tail in the
        # JAX epilogue instead of materializing a padded copy.
        p_flat = jnp.pad(p_flat, (0, padded_n - n))
        t_flat = jnp.pad(t_flat, (0, padded_n - n))

    p2 = p_flat.reshape(rows, _LANES)
    t2 = t_flat.reshape(rows, _LANES)

    row_tile = min(_round_up(int(max_row_tile), g), rows)
    chunk_rows = min(row_tile, 512)
    num_row_blocks = _cdiv(rows, row_tile)

    splits = int(num_core_splits) if num_core_splits else _default_core_splits()
    splits = max(1, min(splits, num_row_blocks))
    tiles_per_split = _cdiv(num_row_blocks, splits)

    full_rows = n // _LANES      # completely valid rows
    rem_lanes = n % _LANES       # valid lanes in row `full_rows` (0 if none)

    kernel = functools.partial(
        _loss_kernel,
        full_rows=full_rows,
        rem_lanes=rem_lanes,
        row_tile=row_tile,
        chunk_rows=chunk_rows,
        tiles_per_split=tiles_per_split,
        single_split=(splits == 1),
        label_smoothing=float(label_smoothing),
    )

    # Extra pipeline depth once per-step compute drops below per-step DMA.
    spec_kwargs = {}
    if tiles_per_split >= 4:
        spec_kwargs["pipeline_mode"] = pl.Buffered(3)

    if splits == 1:
        grid = (tiles_per_split,)
        in_index = lambda i: (i, 0)
        out_index = lambda i: (0, 0)
        dims = ("arbitrary",)
    else:
        # Clamp so a split with fewer real tiles never addresses past the end;
        # the duplicate tile's contribution is masked to zero in-kernel.
        grid = (splits, tiles_per_split)
        in_index = lambda c, i: (
            jnp.minimum(c * tiles_per_split + i, num_row_blocks - 1), 0)
        out_index = lambda c, i: (c, 0)
        dims = ("parallel", "arbitrary")

    nbuf = 3 if tiles_per_split >= 4 else 2
    block_bytes = row_tile * _LANES * (
        jnp.dtype(preds.dtype).itemsize + jnp.dtype(targets.dtype).itemsize)
    interm_bytes = 8 * chunk_rows * _LANES * 4
    vmem_limit = int(min(64 << 20,
                         max(32 << 20,
                             nbuf * block_bytes + interm_bytes + (4 << 20))))

    partials = pl.pallas_call(
        kernel,
        out_shape=jax.ShapeDtypeStruct((splits * 32, _LANES), jnp.float32),
        grid_spec=pltpu.PrefetchScalarGridSpec(
            num_scalar_prefetch=0,
            grid=grid,
            in_specs=[
                pl.BlockSpec((row_tile, _LANES), in_index, **spec_kwargs),
                pl.BlockSpec((row_tile, _LANES), in_index, **spec_kwargs),
            ],
            out_specs=pl.BlockSpec((32, _LANES), out_index),
        ),
        compiler_params=pltpu.CompilerParams(
            dimension_semantics=dims,
            vmem_limit_bytes=vmem_limit),
    )(p2, t2)

    # Tiny epilogue: fold per-split per-lane partials into the 4 global sums
    # and apply the loss formula (runs once on splits*32*128 floats).
    sums = partials.reshape(splits, 4, 8, _LANES).sum(axis=(0, 2, 3))
    intersection, preds_sum, targets_sum, bce_pos_sum = (
        sums[0], sums[1], sums[2], sums[3])
    dice_coef = (2.0 * intersection + _EPS) / (preds_sum + targets_sum + _EPS)
    dice = 1.0 - dice_coef
    bce = -bce_pos_sum / float(n)          # mean reduction
    return dice_weight * dice + bce_weight * bce


def _reference_loss(preds, targets):
    """Pure-JAX reference mirroring the PyTorch module."""
    p = preds.astype(jnp.float32)
    t = targets.astype(jnp.float32)
    st = t * (1.0 - LABEL_SMOOTHING) + (1.0 - t) * LABEL_SMOOTHING
    intersection = jnp.sum(p * st)
    dice_coef = (2.0 * intersection + _EPS) / (jnp.sum(p) + jnp.sum(st) + _EPS)
    dice = 1.0 - dice_coef
    log_p = jnp.maximum(jnp.log(p), _LOG_CLAMP)
    log_1mp = jnp.maximum(jnp.log(1.0 - p), _LOG_CLAMP)
    bce = jnp.mean(-(st * log_p + (1.0 - st) * log_1mp))
    return DICE_WEIGHT * dice + BCE_WEIGHT * bce


if __name__ == "__main__":
    key = jax.random.PRNGKey(0)
    k_p, k_t = jax.random.split(key)

    # Segmentation-head shapes: B=2, C=4, H=W=16 (NCHW).
    shape = (2, 4, 16, 16)
    preds = jax.nn.sigmoid(jax.random.normal(k_p, shape, dtype=jnp.float32))
    # Binary targets travel as bf16 (0/1 exact) -> half the target HBM bytes.
    targets = (jax.random.uniform(k_t, shape) > 0.5).astype(jnp.bfloat16)

    loss = jax.block_until_ready(smoothed_combined_loss(preds, targets))
    ref = jax.block_until_ready(_reference_loss(preds, targets))
    assert jnp.allclose(loss, ref, rtol=1e-5, atol=1e-5), (loss, ref)

    print("KERNEL_OK")
</pallas_src>

<mosaic_0001>
module attributes {stable_mosaic.version = 11 : i64} {
  func.func @_loss_kernel(%arg0: i32, %arg1: memref<16x128xf32, #tpu.memory_space<vmem>>, %arg2: memref<16x128xbf16, #tpu.memory_space<vmem>>, %arg3: memref<32x128xf32, #tpu.memory_space<vmem>>) attributes {dimension_semantics = [#tpu.dimension_semantics<arbitrary>], iteration_bounds = array<i64: 1>, scalar_prefetch = 0 : i64, scratch_operands = 0 : i64, tpu.core_type = #tpu.core_type<tc>, window_params = [{transform_indices = @transform_0, window_bounds = array<i64: 16, 128>}, {transform_indices = @transform_1, window_bounds = array<i64: 16, 128>}, {pipeline_mode = #tpu.pipeline_mode<synchronous>, transform_indices = @transform_2, window_bounds = array<i64: 32, 128>}]} {
    %c0_i32 = arith.constant 0 : i32
    %0 = arith.cmpi eq, %arg0, %c0_i32 : i32
    %1 = arith.extui %0 : i1 to i32
    %c0_i32_0 = arith.constant 0 : i32
    %2 = arith.cmpi ne, %1, %c0_i32_0 : i32
    scf.if %2 {
      %cst = arith.constant 0.000000e+00 : f32
      %12 = vector.broadcast %cst : f32 to vector<32x128xf32>
      %c0 = arith.constant 0 : index
      %c0_6 = arith.constant 0 : index
      %13 = vector.load %arg3[%c0, %c0_6] : memref<32x128xf32, #tpu.memory_space<vmem>>, vector<32x128xf32>
      tpu.vector_store %arg3[%c0, %c0_6], %12 {strides = array<i32>} : memref<32x128xf32, #tpu.memory_space<vmem>>, vector<32x128xf32>,
    } else {
    }
    %c0_i32_1 = arith.constant 0 : i32
    %3 = arith.addi %c0_i32_1, %arg0 : i32
    %c16_i32 = arith.constant 16 : i32
    %4 = arith.muli %3, %c16_i32 : i32
    %c16_i32_2 = arith.constant 16 : i32
    %5 = arith.addi %4, %c16_i32_2 : i32
    %c16_i32_3 = arith.constant 16 : i32
    %6 = arith.cmpi sgt, %5, %c16_i32_3 : i32
    %true = arith.constant true
    %7 = arith.xori %6, %true : i1
    %8 = arith.extui %7 : i1 to i32
    %c0_i32_4 = arith.constant 0 : i32
    %9 = arith.cmpi ne, %8, %c0_i32_4 : i32
    scf.if %9 {
      %c0 = arith.constant 0 : index
      %c0_6 = arith.constant 0 : index
      %12 = vector.load %arg1[%c0, %c0_6] : memref<16x128xf32, #tpu.memory_space<vmem>>, vector<16x128xf32>
      %c0_7 = arith.constant 0 : index
      %c0_8 = arith.constant 0 : index
      %13 = vector.load %arg2[%c0_7, %c0_8] : memref<16x128xbf16, #tpu.memory_space<vmem>>, vector<16x128xbf16>
      %14 = arith.extf %13 : vector<16x128xbf16> to vector<16x128xf32>
      %cst = arith.constant 8.000000e-01 : f32
      %15 = vector.broadcast %cst : f32 to vector<16x128xf32>
      %16 = arith.mulf %14, %15 : vector<16x128xf32>
      %cst_9 = arith.constant 1.000000e-01 : f32
      %17 = vector.broadcast %cst_9 : f32 to vector<16x128xf32>
      %18 = arith.addf %16, %17 : vector<16x128xf32>
      %19 = math.log %12 : vector<16x128xf32>
      %cst_10 = arith.constant -1.000000e+02 : f32
      %20 = vector.broadcast %cst_10 : f32 to vector<16x128xf32>
      %21 = arith.maximumf %19, %20 : vector<16x128xf32>
      %cst_11 = arith.constant 1.000000e+00 : f32
      %22 = vector.broadcast %cst_11 : f32 to vector<16x128xf32>
      %23 = arith.subf %22, %12 : vector<16x128xf32>
      %24 = math.log %23 : vector<16x128xf32>
      %cst_12 = arith.constant -1.000000e+02 : f32
      %25 = vector.broadcast %cst_12 : f32 to vector<16x128xf32>
      %26 = arith.maximumf %24, %25 : vector<16x128xf32>
      %27 = arith.mulf %18, %21 : vector<16x128xf32>
      %cst_13 = arith.constant 1.000000e+00 : f32
      %28 = vector.broadcast %cst_13 : f32 to vector<16x128xf32>
      %29 = arith.subf %28, %18 : vector<16x128xf32>
      %30 = arith.mulf %29, %26 : vector<16x128xf32>
      %31 = arith.addf %27, %30 : vector<16x128xf32>
      %c0_14 = arith.constant 0 : index
      %c0_15 = arith.constant 0 : index
      %32 = vector.load %arg3[%c0_14, %c0_15] : memref<32x128xf32, #tpu.memory_space<vmem>>, vector<8x128xf32>
      %33 = arith.mulf %12, %18 : vector<16x128xf32>
      %34 = vector.shape_cast %33 : vector<16x128xf32> to vector<2x8x128xf32>
      %cst_16 = arith.constant dense<0.000000e+00> : vector<8x128xf32>
      %35 = vector.multi_reduction <add>, %34, %cst_16 [0] : vector<2x8x128xf32> to vector<8x128xf32>
      %36 = arith.addf %32, %35 : vector<8x128xf32>
      %c0_17 = arith.constant 0 : index
      %c0_18 = arith.constant 0 : index
      %37 = vector.load %arg3[%c0_17, %c0_18] : memref<32x128xf32, #tpu.memory_space<vmem>>, vector<8x128xf32>
      tpu.vector_store %arg3[%c0_17, %c0_18], %36 {strides = array<i32>} : memref<32x128xf32, #tpu.memory_space<vmem>>, vector<8x128xf32>,
      %c8 = arith.constant 8 : index
      %c0_19 = arith.constant 0 : index
      %38 = vector.load %arg3[%c8, %c0_19] : memref<32x128xf32, #tpu.memory_space<vmem>>, vector<8x128xf32>
      %39 = vector.shape_cast %12 : vector<16x128xf32> to vector<2x8x128xf32>
      %cst_20 = arith.constant dense<0.000000e+00> : vector<8x128xf32>
      %40 = vector.multi_reduction <add>, %39, %cst_20 [0] : vector<2x8x128xf32> to vector<8x128xf32>
      %41 = arith.addf %38, %40 : vector<8x128xf32>
      %c8_21 = arith.constant 8 : index
      %c0_22 = arith.constant 0 : index
      %42 = vector.load %arg3[%c8_21, %c0_22] : memref<32x128xf32, #tpu.memory_space<vmem>>, vector<8x128xf32>
      tpu.vector_store %arg3[%c8_21, %c0_22], %41 {strides = array<i32>} : memref<32x128xf32, #tpu.memory_space<vmem>>, vector<8x128xf32>,
      %c16 = arith.constant 16 : index
      %c0_23 = arith.constant 0 : index
      %43 = vector.load %arg3[%c16, %c0_23] : memref<32x128xf32, #tpu.memory_space<vmem>>, vector<8x128xf32>
      %44 = vector.shape_cast %18 : vector<16x128xf32> to vector<2x8x128xf32>
      %cst_24 = arith.constant dense<0.000000e+00> : vector<8x128xf32>
      %45 = vector.multi_reduction <add>, %44, %cst_24 [0] : vector<2x8x128xf32> to vector<8x128xf32>
      %46 = arith.addf %43, %45 : vector<8x128xf32>
      %c16_25 = arith.constant 16 : index
      %c0_26 = arith.constant 0 : index
      %47 = vector.load %arg3[%c16_25, %c0_26] : memref<32x128xf32, #tpu.memory_space<vmem>>, vector<8x128xf32>
      tpu.vector_store %arg3[%c16_25, %c0_26], %46 {strides = array<i32>} : memref<32x128xf32, #tpu.memory_space<vmem>>, vector<8x128xf32>,
      %c24 = arith.constant 24 : index
      %c0_27 = arith.constant 0 : index
      %48 = vector.load %arg3[%c24, %c0_27] : memref<32x128xf32, #tpu.memory_space<vmem>>, vector<8x128xf32>
      %49 = vector.shape_cast %31 : vector<16x128xf32> to vector<2x8x128xf32>
      %cst_28 = arith.constant dense<0.000000e+00> : vector<8x128xf32>
      %50 = vector.multi_reduction <add>, %49, %cst_28 [0] : vector<2x8x128xf32> to vector<8x128xf32>
      %51 = arith.addf %48, %50 : vector<8x128xf32>
      %c24_29 = arith.constant 24 : index
      %c0_30 = arith.constant 0 : index
      %52 = vector.load %arg3[%c24_29, %c0_30] : memref<32x128xf32, #tpu.memory_space<vmem>>, vector<8x128xf32>
      tpu.vector_store %arg3[%c24_29, %c0_30], %51 {strides = array<i32>} : memref<32x128xf32, #tpu.memory_space<vmem>>, vector<8x128xf32>,
    } else {
    }
    %10 = arith.extui %6 : i1 to i32
    %c0_i32_5 = arith.constant 0 : i32
    %11 = arith.cmpi ne, %10, %c0_i32_5 : i32
    scf.if %11 {
      %c0 = arith.constant 0 : index
      %c0_6 = arith.constant 0 : index
      %12 = vector.load %arg1[%c0, %c0_6] : memref<16x128xf32, #tpu.memory_space<vmem>>, vector<16x128xf32>
      %c0_7 = arith.constant 0 : index
      %c0_8 = arith.constant 0 : index
      %13 = vector.load %arg2[%c0_7, %c0_8] : memref<16x128xbf16, #tpu.memory_space<vmem>>, vector<16x128xbf16>
      %14 = arith.extf %13 : vector<16x128xbf16> to vector<16x128xf32>
      %cst = arith.constant 8.000000e-01 : f32
      %15 = vector.broadcast %cst : f32 to vector<16x128xf32>
      %16 = arith.mulf %14, %15 : vector<16x128xf32>
      %cst_9 = arith.constant 1.000000e-01 : f32
      %17 = vector.broadcast %cst_9 : f32 to vector<16x128xf32>
      %18 = arith.addf %16, %17 : vector<16x128xf32>
      %19 = tpu.iota {dimensions = array<i32: 0>} : vector<16x128xi32>
      %20 = tpu.iota {dimensions = array<i32: 1>} : vector<16x128xi32>
      %c0_i32_10 = arith.constant 0 : i32
      %21 = arith.addi %4, %c0_i32_10 : i32
      %22 = vector.broadcast %21 : i32 to vector<16x128xi32>
      %23 = arith.addi %22, %19 : vector<16x128xi32>
      %c16_i32_11 = arith.constant 16 : i32
      %24 = vector.broadcast %c16_i32_11 : i32 to vector<16x128xi32>
      %25 = arith.cmpi slt, %23, %24 : vector<16x128xi32>
      %c16_i32_12 = arith.constant 16 : i32
      %26 = vector.broadcast %c16_i32_12 : i32 to vector<16x128xi32>
      %27 = arith.cmpi eq, %23, %26 : vector<16x128xi32>
      %c0_i32_13 = arith.constant 0 : i32
      %28 = vector.broadcast %c0_i32_13 : i32 to vector<16x128xi32>
      %29 = arith.cmpi slt, %20, %28 : vector<16x128xi32>
      %30 = arith.andi %27, %29 : vector<16x128xi1>
      %31 = arith.ori %25, %30 : vector<16x128xi1>
      %cst_14 = arith.constant 0.000000e+00 : f32
      %32 = vector.broadcast %cst_14 : f32 to vector<16x128xf32>
      %33 = arith.select %31, %12, %32 : vector<16x128xi1>, vector<16x128xf32>
      %cst_15 = arith.constant 0.000000e+00 : f32
      %34 = vector.broadcast %cst_15 : f32 to vector<16x128xf32>
      %35 = arith.select %31, %18, %34 : vector<16x128xi1>, vector<16x128xf32>
      %36 = math.log %33 : vector<16x128xf32>
      %cst_16 = arith.constant -1.000000e+02 : f32
      %37 = vector.broadcast %cst_16 : f32 to vector<16x128xf32>
      %38 = arith.maximumf %36, %37 : vector<16x128xf32>
      %cst_17 = arith.constant 1.000000e+00 : f32
      %39 = vector.broadcast %cst_17 : f32 to vector<16x128xf32>
      %40 = arith.subf %39, %33 : vector<16x128xf32>
      %41 = math.log %40 : vector<16x128xf32>
      %cst_18 = arith.constant -1.000000e+02 : f32
      %42 = vector.broadcast %cst_18 : f32 to vector<16x128xf32>
      %43 = arith.maximumf %41, %42 : vector<16x128xf32>
      %44 = arith.mulf %35, %38 : vector<16x128xf32>
      %cst_19 = arith.constant 1.000000e+00 : f32
      %45 = vector.broadcast %cst_19 : f32 to vector<16x128xf32>
      %46 = arith.subf %45, %35 : vector<16x128xf32>
      %47 = arith.mulf %46, %43 : vector<16x128xf32>
      %48 = arith.addf %44, %47 : vector<16x128xf32>
      %c0_20 = arith.constant 0 : index
      %c0_21 = arith.constant 0 : index
      %49 = vector.load %arg3[%c0_20, %c0_21] : memref<32x128xf32, #tpu.memory_space<vmem>>, vector<8x128xf32>
      %50 = arith.mulf %33, %35 : vector<16x128xf32>
      %51 = vector.shape_cast %50 : vector<16x128xf32> to vector<2x8x128xf32>
      %cst_22 = arith.constant dense<0.000000e+00> : vector<8x128xf32>
      %52 = vector.multi_reduction <add>, %51, %cst_22 [0] : vector<2x8x128xf32> to vector<8x128xf32>
      %53 = arith.addf %49, %52 : vector<8x128xf32>
      %c0_23 = arith.constant 0 : index
      %c0_24 = arith.constant 0 : index
      %54 = vector.load %arg3[%c0_23, %c0_24] : memref<32x128xf32, #tpu.memory_space<vmem>>, vector<8x128xf32>
      tpu.vector_store %arg3[%c0_23, %c0_24], %53 {strides = array<i32>} : memref<32x128xf32, #tpu.memory_space<vmem>>, vector<8x128xf32>,
      %c8 = arith.constant 8 : index
      %c0_25 = arith.constant 0 : index
      %55 = vector.load %arg3[%c8, %c0_25] : memref<32x128xf32, #tpu.memory_space<vmem>>, vector<8x128xf32>
      %56 = vector.shape_cast %33 : vector<16x128xf32> to vector<2x8x128xf32>
      %cst_26 = arith.constant dense<0.000000e+00> : vector<8x128xf32>
      %57 = vector.multi_reduction <add>, %56, %cst_26 [0] : vector<2x8x128xf32> to vector<8x128xf32>
      %58 = arith.addf %55, %57 : vector<8x128xf32>
      %c8_27 = arith.constant 8 : index
      %c0_28 = arith.constant 0 : index
      %59 = vector.load %arg3[%c8_27, %c0_28] : memref<32x128xf32, #tpu.memory_space<vmem>>, vector<8x128xf32>
      tpu.vector_store %arg3[%c8_27, %c0_28], %58 {strides = array<i32>} : memref<32x128xf32, #tpu.memory_space<vmem>>, vector<8x128xf32>,
      %c16 = arith.constant 16 : index
      %c0_29 = arith.constant 0 : index
      %60 = vector.load %arg3[%c16, %c0_29] : memref<32x128xf32, #tpu.memory_space<vmem>>, vector<8x128xf32>
      %61 = vector.shape_cast %35 : vector<16x128xf32> to vector<2x8x128xf32>
      %cst_30 = arith.constant dense<0.000000e+00> : vector<8x128xf32>
      %62 = vector.multi_reduction <add>, %61, %cst_30 [0] : vector<2x8x128xf32> to vector<8x128xf32>
      %63 = arith.addf %60, %62 : vector<8x128xf32>
      %c16_31 = arith.constant 16 : index
      %c0_32 = arith.constant 0 : index
      %64 = vector.load %arg3[%c16_31, %c0_32] : memref<32x128xf32, #tpu.memory_space<vmem>>, vector<8x128xf32>
      tpu.vector_store %arg3[%c16_31, %c0_32], %63 {strides = array<i32>} : memref<32x128xf32, #tpu.memory_space<vmem>>, vector<8x128xf32>,
      %c24 = arith.constant 24 : index
      %c0_33 = arith.constant 0 : index
      %65 = vector.load %arg3[%c24, %c0_33] : memref<32x128xf32, #tpu.memory_space<vmem>>, vector<8x128xf32>
      %66 = vector.shape_cast %48 : vector<16x128xf32> to vector<2x8x128xf32>
      %cst_34 = arith.constant dense<0.000000e+00> : vector<8x128xf32>
      %67 = vector.multi_reduction <add>, %66, %cst_34 [0] : vector<2x8x128xf32> to vector<8x128xf32>
      %68 = arith.addf %65, %67 : vector<8x128xf32>
      %c24_35 = arith.constant 24 : index
      %c0_36 = arith.constant 0 : index
      %69 = vector.load %arg3[%c24_35, %c0_36] : memref<32x128xf32, #tpu.memory_space<vmem>>, vector<8x128xf32>
      tpu.vector_store %arg3[%c24_35, %c0_36], %68 {strides = array<i32>} : memref<32x128xf32, #tpu.memory_space<vmem>>, vector<8x128xf32>,
    } else {
    }
    return
  }
  func.func @transform_0(%arg0: i32) -> (i32, i32) {
    %c0_i32 = arith.constant 0 : i32
    %c0_i32_0 = arith.constant 0 : i32
    return %arg0, %c0_i32 : i32, i32
  }
  func.func @transform_1(%arg0: i32) -> (i32, i32) {
    %c0_i32 = arith.constant 0 : i32
    %c0_i32_0 = arith.constant 0 : i32
    return %arg0, %c0_i32 : i32, i32
  }
  func.func @transform_2(%arg0: i32) -> (i32, i32) {
    %c0_i32 = arith.constant 0 : i32
    %c0_i32_0 = arith.constant 0 : i32
    %c0_i32_1 = arith.constant 0 : i32
    return %c0_i32, %c0_i32_0 : i32, i32
  }
}

</mosaic_0001>

<llo_original>
// kernel: tpu_custom_call.1
$region0: #{tpu_custom_call.1}
  #allocation0 [shape = 'u32[]', space=smem, size = 0x4, offset = 0x4, fixed_abs, tag = 'smem constant byte address 0x4 - core index']
  #allocation1 [shape = 'u32[72,128]{1,0:T(1,128)}', space=vmem, size = 0x9000, scoped, tag = 'internal scratch']
  %s0 = inlined_call_operand.hbm [shape: f32[16,128], index: 0, kind: input, shape index: {}]
  %s1 = inlined_call_operand.hbm [shape: bf16[16,128], index: 1, kind: input, shape index: {}]
  %s2 = inlined_call_operand.hbm [shape: f32[32,128], index: 2, kind: output, shape index: {}]
  %s3 = sld [smem:[#allocation0]]
  $region38: #{tpu_custom_call.1} parent=0
    _
  %s5 = ssub.s32 1, %s3
  %s6 = scalar_select 0, %s5, %s3
  $region1: #{tpu_custom_call.1} parent=0
    #allocation2 [shape = 'u8[8192]{0}', space=vmem, size = 0x2000, scoped, tag = 'input window, operand 0, single buffered']
    #allocation3 [shape = 's32[1]{0}', space=sflag, size = 0x4, scoped, tag = 'scoped memory for tpu_custom_call.1']
    #allocation4 [shape = 's32[1]{0}', space=sflag, size = 0x4, scoped, tag = 'scoped memory for tpu_custom_call.1']
    #allocation5 [shape = 'u8[4096]{0}', space=vmem, size = 0x1000, scoped, tag = 'input window, operand 1, single buffered']
    #allocation6 [shape = 's32[1]{0}', space=sflag, size = 0x4, scoped, tag = 'scoped memory for tpu_custom_call.1']
    #allocation7 [shape = 'u8[16384]{0}', space=vmem, size = 0x4000, scoped, tag = 'output window, operand 0, single buffered']
    %7 = vsyncpa [#allocation3], 0
    %8 = vsyncpa [#allocation6], 0
    %9 = vsyncpa [#allocation4], 0
    // Predicated region
    $region2: #{tpu_custom_call.1} parent=1 // pred_check
      _
    $region3: #{tpu_custom_call.1} parent=1 // pred_check_branch
      %11 = sbr.rel (0) target = $region5
    $region4: #{tpu_custom_call.1} parent=1 // pred_region
      %13 = vsyncadd [#allocation3], 0
      %s14 = sshll.u32 %s0, 4
      %s15 = int_to_ptr.hbm [resolvable:$true] %s14
      %s16 = sshll.u32 [#allocation2], 4
      %s17 = int_to_ptr.vmem [resolvable:$true] %s16
      %22 = dma.hbm_to_vmem [thread:$0]  %s15, 256, %s17, [#allocation3], 128, 128, 8
    $region5: #{tpu_custom_call.1} parent=1 // pred_fallthru
      _
    // Predicated region
    $region6: #{tpu_custom_call.1} parent=1 // pred_check
      _
    $region7: #{tpu_custom_call.1} parent=1 // pred_check_branch
      %24 = sbr.rel (0) target = $region9
    $region8: #{tpu_custom_call.1} parent=1 // pred_region
      %26 = vsyncadd [#allocation6], 0
      %s27 = sshll.u32 %s1, 4
      %s28 = int_to_ptr.hbm [resolvable:$true] %s27
      %s29 = sshll.u32 [#allocation5], 4
      %s30 = int_to_ptr.vmem [resolvable:$true] %s29
      %35 = dma.hbm_to_vmem [thread:$0]  %s28, 128, %s30, [#allocation6], 64, 64, 4
    $region9: #{tpu_custom_call.1} parent=1 // pred_fallthru
      _
    // Predicated region
    $region10: #{tpu_custom_call.1} parent=1 // pred_check
      _
    $region11: #{tpu_custom_call.1} parent=1 // pred_check_branch
      %37 = sbr.rel (0) target = $region13
    $region12: #{tpu_custom_call.1} parent=1 // pred_region
      %39 = dma.done [#allocation3], 256
    $region13: #{tpu_custom_call.1} parent=1 // pred_fallthru
      _
    // Predicated region
    $region14: #{tpu_custom_call.1} parent=1 // pred_check
      _
    $region15: #{tpu_custom_call.1} parent=1 // pred_check_branch
      %41 = sbr.rel (0) target = $region17
    $region16: #{tpu_custom_call.1} parent=1 // pred_region
      %43 = dma.done [#allocation6], 128
    $region17: #{tpu_custom_call.1} parent=1 // pred_fallthru
      _
    %p44 = scmp.eq.s32.totalorder 0, 0
    // Predicated region
    $region18: #{tpu_custom_call.1} parent=1 // pred_check
      %p45 = pneg %p44
    $region19: #{tpu_custom_call.1} parent=1 // pred_check_branch
      %47 = sbr.rel (%p45) target = $region21
    $region20: #{tpu_custom_call.1} parent=1 // pred_region
      %48 = vst [vmem:[#allocation7] sm:$0xff] 0.0
      %49 = vst [vmem:[#allocation7 + $0x8] sm:$0xff] 0.0
      %50 = vst [vmem:[#allocation7 + $0x10] sm:$0xff] 0.0
      %51 = vst [vmem:[#allocation7 + $0x18] sm:$0xff] 0.0
    $region21: #{tpu_custom_call.1} parent=1 // pred_fallthru
      _
    %s52 = smul.u32 0, 16
    %s53 = sadd.s32 %s52, 16
    %p54 = scmp.gt.s32.totalorder %s53, 16
    %p55 = scmp.le.s32.totalorder %s53, 16
    // Predicated region
    $region22: #{tpu_custom_call.1} parent=1 // pred_check
      %p56 = pneg %p55
    $region23: #{tpu_custom_call.1} parent=1 // pred_check_branch
      %58 = sbr.rel (%p56) target = $region25
    $region24: #{tpu_custom_call.1} parent=1 // pred_region
      %v59 = vld [vmem:[#allocation2] sm:$0xff]
      %v60 = vld [vmem:[#allocation2 + $0x8] sm:$0xff]
      %v61 = vld [vmem:[#allocation5] sm:$0xf]
      %v62 = vld [vmem:[#allocation5 + $0x4] sm:$0xf]
      %v63 = vunpack.c.l.bf16 %v61
      %v64 = vunpack.c.l.bf16 %v62
      %v65 = vmul.f32 %v63, 0.8
      %v66 = vmul.f32 %v64, 0.8
      %v67 = vadd.f32 %v65, 0.1
      %v68 = vadd.f32 %v66, 0.1
      %v69 = vlog2.pop %v59
      %v70 = vmul.f32 %v69, 0.6931472
      %v71 = vlog2.pop %v60
      %v72 = vmul.f32 %v71, 0.6931472
      %v73 = vmax.f32 %v70, -100.0
      %v74 = vmax.f32 %v72, -100.0
      %v75 = vsub.f32 1.0, %v59
      %v76 = vsub.f32 1.0, %v60
      %v77 = vlog2.pop %v75
      %v78 = vmul.f32 %v77, 0.6931472
      %v79 = vlog2.pop %v76
      %v80 = vmul.f32 %v79, 0.6931472
      %v81 = vmax.f32 %v78, -100.0
      %v82 = vmax.f32 %v80, -100.0
      %v83 = vmul.f32 %v67, %v73
      %v84 = vmul.f32 %v68, %v74
      %v85 = vsub.f32 1.0, %v67
      %v86 = vsub.f32 1.0, %v68
      %v87 = vmul.f32 %v85, %v81
      %v88 = vmul.f32 %v86, %v82
      %v89 = vadd.f32 %v83, %v87
      %v90 = vadd.f32 %v84, %v88
      %v91 = vld [vmem:[#allocation7] sm:$0xff]
      %v92 = vmul.f32 %v59, %v67
      %v93 = vmul.f32 %v60, %v68
      %v94 = vadd.f32 %v92, %v93
      %v95 = vadd.f32 %v91, %v94
      %96 = vst [vmem:[#allocation7] sm:$0xff] %v95
      %v97 = vld [vmem:[#allocation7 + $0x8] sm:$0xff]
      %v98 = vadd.f32 %v59, %v60
      %v99 = vadd.f32 %v97, %v98
      %100 = vst [vmem:[#allocation7 + $0x8] sm:$0xff] %v99
      %v101 = vld [vmem:[#allocation7 + $0x10] sm:$0xff]
      %v102 = vadd.f32 %v67, %v68
      %v103 = vadd.f32 %v101, %v102
      %104 = vst [vmem:[#allocation7 + $0x10] sm:$0xff] %v103
      %v105 = vld [vmem:[#allocation7 + $0x18] sm:$0xff]
      %v106 = vadd.f32 %v89, %v90
      %v107 = vadd.f32 %v105, %v106
      %108 = vst [vmem:[#allocation7 + $0x18] sm:$0xff] %v107
    $region25: #{tpu_custom_call.1} parent=1 // pred_fallthru
      _
    // Predicated region
    $region26: #{tpu_custom_call.1} parent=1 // pred_check
      %p109 = pneg %p54
    $region27: #{tpu_custom_call.1} parent=1 // pred_check_branch
      %111 = sbr.rel (%p109) target = $region29
    $region28: #{tpu_custom_call.1} parent=1 // pred_region
      %v112 = vld [vmem:[#allocation2] sm:$0xff]
      %v113 = vld [vmem:[#allocation2 + $0x8] sm:$0xff]
      %v114 = vld [vmem:[#allocation5] sm:$0xf]
      %v115 = vld [vmem:[#allocation5 + $0x4] sm:$0xf]
      %v116 = vunpack.c.l.bf16 %v114
      %v117 = vunpack.c.l.bf16 %v115
      %v118 = vmul.f32 %v116, 0.8
      %v119 = vmul.f32 %v117, 0.8
      %v120 = vadd.f32 %v118, 0.1
      %v121 = vadd.f32 %v119, 0.1
      %v122 = vlaneseq
      %v123 = vshrl.u32 %v122, 7
      %v124 = vadd.s32 %v123, 8
      %v125 = vlaneseq
      %v126 = vand.u32 %v125, 127
      %v127 = vstv %s52
      %v128 = vadd.s32 %v127, %v123
      %v129 = vadd.s32 %v127, %v124
      %vm130 = vcmp.lt.s32.totalorder %v128, 16
      %vm131 = vcmp.lt.s32.totalorder %v129, 16
      %vm132 = vcmp.eq.s32.totalorder %v128, 16
      %vm133 = vcmp.eq.s32.totalorder %v129, 16
      %vm134 = vcmp.lt.s32.totalorder %v126, 0
      %vm135 = vmand %vm132, %vm134
      %vm136 = vmand %vm133, %vm134
      %vm137 = vmor %vm130, %vm135
      %vm138 = vmor %vm131, %vm136
      %v139 = vsel %vm137, %v112, 0.0
      %v140 = vsel %vm138, %v113, 0.0
      %v141 = vsel %vm137, %v120, 0.0
      %v142 = vsel %vm138, %v121, 0.0
      %v143 = vlog2.pop %v139
      %v144 = vmul.f32 %v143, 0.6931472
      %v145 = vlog2.pop %v140
      %v146 = vmul.f32 %v145, 0.6931472
      %v147 = vmax.f32 %v144, -100.0
      %v148 = vmax.f32 %v146, -100.0
      %v149 = vsub.f32 1.0, %v139
      %v150 = vsub.f32 1.0, %v140
      %v151 = vlog2.pop %v149
      %v152 = vmul.f32 %v151, 0.6931472
      %v153 = vlog2.pop %v150
      %v154 = vmul.f32 %v153, 0.6931472
      %v155 = vmax.f32 %v152, -100.0
      %v156 = vmax.f32 %v154, -100.0
      %v157 = vmul.f32 %v141, %v147
      %v158 = vmul.f32 %v142, %v148
      %v159 = vsub.f32 1.0, %v141
      %v160 = vsub.f32 1.0, %v142
      %v161 = vmul.f32 %v159, %v155
      %v162 = vmul.f32 %v160, %v156
      %v163 = vadd.f32 %v157, %v161
      %v164 = vadd.f32 %v158, %v162
      %v165 = vld [vmem:[#allocation7] sm:$0xff]
      %v166 = vmul.f32 %v139, %v141
      %v167 = vmul.f32 %v140, %v142
      %v168 = vadd.f32 %v166, %v167
      %v169 = vadd.f32 %v165, %v168
      %170 = vst [vmem:[#allocation7] sm:$0xff] %v169
      %v171 = vld [vmem:[#allocation7 + $0x8] sm:$0xff]
      %v172 = vadd.f32 %v139, %v140
      %v173 = vadd.f32 %v171, %v172
      %174 = vst [vmem:[#allocation7 + $0x8] sm:$0xff] %v173
      %v175 = vld [vmem:[#allocation7 + $0x10] sm:$0xff]
      %v176 = vadd.f32 %v141, %v142
      %v177 = vadd.f32 %v175, %v176
      %178 = vst [vmem:[#allocation7 + $0x10] sm:$0xff] %v177
      %v179 = vld [vmem:[#allocation7 + $0x18] sm:$0xff]
      %v180 = vadd.f32 %v163, %v164
      %v181 = vadd.f32 %v179, %v180
      %182 = vst [vmem:[#allocation7 + $0x18] sm:$0xff] %v181
    $region29: #{tpu_custom_call.1} parent=1 // pred_fallthru
      _
    // Predicated region
    $region30: #{tpu_custom_call.1} parent=1 // pred_check
      _
    $region31: #{tpu_custom_call.1} parent=1 // pred_check_branch
      %184 = sbr.rel (0) target = $region33
    $region32: #{tpu_custom_call.1} parent=1 // pred_region
      %186 = vsyncadd [#allocation4], 0
      %s187 = sshll.u32 [#allocation7], 4
      %s188 = int_to_ptr.vmem [resolvable:$true] %s187
      %s189 = sshll.u32 %s2, 4
      %s190 = int_to_ptr.hbm [resolvable:$true] %s189
      %195 = dma.vmem_to_hbm [thread:$0]  %s188, 512, %s190, [#allocation4], 128, 128, 8
    $region33: #{tpu_custom_call.1} parent=1 // pred_fallthru
      _
    // Predicated region
    $region34: #{tpu_custom_call.1} parent=1 // pred_check
      _
    $region35: #{tpu_custom_call.1} parent=1 // pred_check_branch
      %197 = sbr.rel (0) target = $region37
    $region36: #{tpu_custom_call.1} parent=1 // pred_region
      %199 = dma.done [#allocation4], 512
    $region37: #{tpu_custom_call.1} parent=1 // pred_fallthru
      _
    %200 = vsyncpa [#allocation3], 1
    %201 = vsyncpa [#allocation6], 1
    %202 = vsyncpa [#allocation4], 1

</llo_original>
